<compile_context>
chip_gen: v6e
topology: v6e:2x2x1
jax: 0.10.0
libtpu: 0.0.40
codegen_flags: <defaults>
</compile_context>

<pallas_src>
import jax
import jax.numpy as jnp
from jax.experimental import pallas as pl
from jax.experimental.pallas import tpu as pltpu


def _round_up(n, m):
    return ((n + m - 1) // m) * m


def _cdiv(a, b):
    return -(-a // b)


_HAS_BUFFERED = hasattr(pl, "Buffered")


def _block_spec(shape, index_map, buffers=None):
    """BlockSpec with an optional explicit buffer count (graceful fallback)."""
    if buffers is not None and _HAS_BUFFERED:
        try:
            return pl.BlockSpec(shape, index_map, pipeline_mode=pl.Buffered(buffers))
        except TypeError:          # pipeline_mode kwarg not available in this jax
            pass
    return pl.BlockSpec(shape, index_map)


def _make_projector_kernel(se_valid, tk, n_k):
    mask_last = (se_valid != n_k * tk)          # last K block is ragged

    def kernel(x_ref, stats_ref, w0a_ref, w0b_ref, b0_ref,
               w1_ref, b1_ref, w2_ref, y_ref, acc_ref):
        k = pl.program_id(1)

        # k == 0: seed the accumulator with the stats branch + bias.
        @pl.when(k == 0)
        def _():
            s = stats_ref[...].astype(w0b_ref.dtype)
            acc_ref[...] = (jnp.dot(s, w0b_ref[...],
                                    preferred_element_type=jnp.float32)
                            + b0_ref[...])

        # Streaming K-tile of the fused (circular-conv o Linear0) matmul.
        xb = x_ref[...]                          # f32 block, cast on the VPU below
        if mask_last:
            # Zero the ragged tail columns of the last K block so stale VMEM
            # never leaks into the accumulator (fused w0a rows there are 0 too).
            col = jax.lax.broadcasted_iota(jnp.int32, xb.shape, 1)
            valid = se_valid - k * tk
            xb = jnp.where(col < valid, xb, 0.0)
        acc_ref[...] += jnp.dot(xb.astype(w0a_ref.dtype), w0a_ref[...],
                                preferred_element_type=jnp.float32)

        # k == last: ReLU -> Linear1 -> ReLU -> Linear2 -> lane-dense bf16 store.
        @pl.when(k == n_k - 1)
        def _():
            h = jnp.maximum(acc_ref[...], 0.0)
            h = jnp.dot(h.astype(w1_ref.dtype), w1_ref[...],
                        preferred_element_type=jnp.float32) + b1_ref[...]
            h = jnp.maximum(h, 0.0)
            y = jnp.dot(h.astype(w2_ref.dtype), w2_ref[...],
                        preferred_element_type=jnp.float32)
            y_ref[...] = y.astype(y_ref.dtype)

    return kernel


def init_projector_params(key, enc_in, seq_len, hidden_dims, output_dim,
                          kernel_size=3):
    ks = jax.random.split(key, 6)
    scale = 0.1
    return {
        "conv_w": scale * jax.random.normal(ks[0], (1, seq_len, kernel_size),
                                            jnp.float32),
        "w0": scale * jax.random.normal(ks[1], (2 * enc_in, hidden_dims[0]),
                                        jnp.float32),
        "b0": scale * jax.random.normal(ks[2], (hidden_dims[0],), jnp.float32),
        "w1": scale * jax.random.normal(ks[3], (hidden_dims[0], hidden_dims[1]),
                                        jnp.float32),
        "b1": scale * jax.random.normal(ks[4], (hidden_dims[1],), jnp.float32),
        "w2": scale * jax.random.normal(ks[5], (hidden_dims[1], output_dim),
                                        jnp.float32),
    }


def prepare_projector_params(params, enc_in, seq_len, *,
                             max_batch_tile=512,
                             vmem_tile_budget=16 << 20):
    """One-time (per weight update) conv folding + lane padding + tiling plan."""
    E, S = enc_in, seq_len
    SE = S * E
    conv_w = params["conv_w"]                        # [1, S, K]
    K = conv_w.shape[-1]
    assert K % 2 == 1, "even kernel_size needs PyTorch's asymmetric circular pad"
    # TODO(synk): support even kernel_size (asymmetric circular padding).
    pad = (K - 1) // 2

    w0 = params["w0"]                                # [2E, H0]
    w0a, w0b = w0[:E], w0[E:]
    H0 = w0.shape[1]
    H1 = params["w1"].shape[1]
    out_dim = params["w2"].shape[1]

    H0p = _round_up(H0, 128)                         # lane-dense hidden dims
    H1p = _round_up(H1, 128)
    out_pad = _round_up(out_dim, 128)

    # fused[s, e_src, h] = sum_k conv_w[0, s, k] * w0a[(e_src - k + pad) % E, h]
    # built via K rolls -- the [S*E, E] circulant is never materialized.
    fused = jnp.zeros((S, E, H0), jnp.float32)
    for k in range(K):
        rolled = jnp.roll(w0a, k - pad, axis=0)      # [E, H0]
        fused = fused + conv_w[0, :, k][:, None, None] * rolled[None, :, :]
    fused = fused.reshape(SE, H0)

    # --- K-tiling plan for the first matmul (bounds the VMEM working set). ---
    TBmax = max_batch_tile
    fixed = (TBmax * H0p * 4                         # f32 accumulator scratch
             + 2 * TBmax * E * 4                     # stats blocks (f32)
             + 2 * TBmax * out_pad * 2               # output blocks (bf16)
             + 2 * (E * H0p + H0p * H1p + H1p * out_pad) * 2   # w0b, w1, w2
             + 2 * (H0p + H1p) * 4)                  # biases
    per_col = 2 * TBmax * 4 + 2 * H0p * 2            # x stream (f32) + w0a stream
    tk_budget = max(128, (vmem_tile_budget - fixed) // per_col)
    if SE <= max(tk_budget, 512):
        tk = SE                                      # single K step, no masking
    else:
        tk = max(128, (tk_budget // 128) * 128)      # lane-aligned K tile
    n_k = _cdiv(SE, tk)
    SE_pad = n_k * tk                                # zero rows -> safe partial block

    fused = jnp.pad(fused, ((0, SE_pad - SE), (0, H0p - H0)))
    w0b_p = jnp.pad(w0b, ((0, 0), (0, H0p - H0)))
    b0_p = jnp.pad(params["b0"], (0, H0p - H0)).reshape(1, H0p)
    w1_p = jnp.pad(params["w1"], ((0, H0p - H0), (0, H1p - H1)))
    b1_p = jnp.pad(params["b1"], (0, H1p - H1)).reshape(1, H1p)
    w2_p = jnp.pad(params["w2"], ((0, H1p - H1), (0, out_pad - out_dim)))

    return {
        "w0a": fused.astype(jnp.bfloat16),           # [SE_pad, H0p]
        "w0b": w0b_p.astype(jnp.bfloat16),           # [E, H0p]
        "b0": b0_p.astype(jnp.float32),              # [1, H0p]
        "w1": w1_p.astype(jnp.bfloat16),             # [H0p, H1p]
        "b1": b1_p.astype(jnp.float32),              # [1, H1p]
        "w2": w2_p.astype(jnp.bfloat16),             # [H1p, out_pad]
        "seq_len": S, "enc_in": E,
        "H0p": H0p, "H1p": H1p,
        "out_dim": out_dim, "out_pad": out_pad,
        "tk": tk, "n_k": n_k, "SE_pad": SE_pad,
        "max_batch_tile": max_batch_tile,
    }


def _choose_tb(batch, tb_max):
    if batch <= 16:
        return batch                                 # full-dim block (exempt)
    n_target = max(2, _cdiv(batch, tb_max))          # >=2 steps: both v7x TCs work
    tb = _round_up(_cdiv(batch, n_target), 16)       # bf16 packs 16 rows per vreg
    return min(tb, _round_up(batch, 16))


def projector_forward(x, stats, prep):
    """x: [B, seq_len, enc_in] f32, stats: [B, 1, enc_in] f32 -> [B, output_dim] f32."""
    B, S, E = x.shape
    assert S == prep["seq_len"] and E == prep["enc_in"]
    SE = S * E
    tk, n_k = prep["tk"], prep["n_k"]
    H0p, H1p = prep["H0p"], prep["H1p"]
    out_pad, out_dim = prep["out_pad"], prep["out_dim"]

    # Free views only -- no wrapper-side cast / pad pass over x; it is DMA'd as
    # f32 and cast to bf16 on the VPU inside the kernel.
    x_flat = x.reshape(B, SE)
    stats_flat = stats.reshape(B, E)

    TB = _choose_tb(B, prep["max_batch_tile"])
    n_b = _cdiv(B, TB)
    steps = n_b * n_k

    # Buffering: single-buffer large resident weights; deepen the x stream only
    # when there are enough grid steps (and VMEM) for it to pay off.
    def weight_bufs(nbytes):
        return 1 if nbytes >= (1 << 19) else None

    x_bufs = 3 if (steps >= 3 and 3 * TB * tk * 4 <= (12 << 20)) else None
    w0a_bufs = weight_bufs(prep["w0a"].size * 2) if n_k == 1 else None

    in_specs = [
        _block_spec((TB, tk), lambda i, k: (i, k), x_bufs),            # x (f32)
        _block_spec((TB, E), lambda i, k: (i, 0), None),               # stats (f32)
        _block_spec((tk, H0p), lambda i, k: (k, 0), w0a_bufs),         # fused w0a
        _block_spec((E, H0p), lambda i, k: (0, 0),
                    weight_bufs(prep["w0b"].size * 2)),                # w0b
        _block_spec((1, H0p), lambda i, k: (0, 0), None),              # b0
        _block_spec((H0p, H1p), lambda i, k: (0, 0),
                    weight_bufs(prep["w1"].size * 2)),                 # w1
        _block_spec((1, H1p), lambda i, k: (0, 0), None),              # b1
        _block_spec((H1p, out_pad), lambda i, k: (0, 0),
                    weight_bufs(prep["w2"].size * 2)),                 # w2
    ]
    out_spec = _block_spec((TB, out_pad), lambda i, k: (i, 0), None)

    # Footprint-derived scoped-VMEM limit: v5e's default is 16 MiB (too small),
    # v7x's physical VMEM is 64 MiB (stay well under).
    est = ((x_bufs or 2) * TB * tk * 4
           + 2 * TB * E * 4
           + 2 * TB * out_pad * 2
           + (w0a_bufs or 2) * tk * H0p * 2
           + 2 * (E * H0p + H0p * H1p + H1p * out_pad) * 2
           + 2 * (H0p + H1p) * 4
           + TB * H0p * 4)
    vmem_limit = int(min(max(2 * est, 32 << 20), 56 << 20))

    kernel = _make_projector_kernel(SE, tk, n_k)

    y_pad = pl.pallas_call(
        kernel,
        out_shape=jax.ShapeDtypeStruct((B, out_pad), jnp.bfloat16),
        grid=(n_b, n_k),
        in_specs=in_specs,
        out_specs=out_spec,
        scratch_shapes=[pltpu.VMEM((TB, H0p), jnp.float32)],
        compiler_params=pltpu.CompilerParams(
            dimension_semantics=("parallel", "arbitrary"),
            vmem_limit_bytes=vmem_limit,
        ),
    )(x_flat, stats_flat, prep["w0a"], prep["w0b"], prep["b0"],
      prep["w1"], prep["b1"], prep["w2"])

    return y_pad[:, :out_dim].astype(jnp.float32)


def projector_reference(x, stats, params):
    """Pure-JAX reference matching the PyTorch module semantics (f32)."""
    B, S, E = x.shape
    conv_w = params["conv_w"]
    K = conv_w.shape[-1]
    pad = (K - 1) // 2
    # circular padding along the spatial (enc_in) axis
    xp = jnp.concatenate([x[..., -pad:], x, x[..., :pad]], axis=-1)   # [B,S,E+2p]
    conv = jnp.zeros((B, E), jnp.float32)
    for k in range(K):
        conv = conv + jnp.einsum("bse,s->be", xp[..., k:k + E], conv_w[0, :, k])
    feat = jnp.concatenate([conv, stats.reshape(B, E)], axis=1)       # [B, 2E]
    h = jax.nn.relu(feat @ params["w0"] + params["b0"])
    h = jax.nn.relu(h @ params["w1"] + params["b1"])
    return h @ params["w2"]


if __name__ == "__main__":
    B, enc_in, seq_len = 2, 4, 8
    hidden_dims = [32, 32]      # hidden_layers = 2
    output_dim = 4
    # TODO(synk): hidden_layers is fixed at 2 (matching this config); other depths
    # would add more Linear+ReLU stages in the finalize phase of the kernel.

    key = jax.random.PRNGKey(0)
    kx, ks, kp = jax.random.split(key, 3)
    x = jax.random.normal(kx, (B, seq_len, enc_in), jnp.float32)
    stats = jax.random.normal(ks, (B, 1, enc_in), jnp.float32)
    params = init_projector_params(kp, enc_in, seq_len, hidden_dims, output_dim)

    prep = prepare_projector_params(params, enc_in, seq_len)   # once per weight update
    y = projector_forward(x, stats, prep)
    y = jax.block_until_ready(y)

    y_ref = projector_reference(x, stats, params)
    assert y.shape == (B, output_dim)
    # bf16 matmul operands + bf16 output store, f32 accumulation -> small drift.
    assert jnp.allclose(y, y_ref, atol=3e-2, rtol=3e-2), (y, y_ref)

    print("KERNEL_OK")
</pallas_src>

<mosaic_0001>
module attributes {stable_mosaic.version = 11 : i64} {
  func.func @kernel(%arg0: i32, %arg1: i32, %arg2: memref<2x32xf32, #tpu.memory_space<vmem>>, %arg3: memref<2x4xf32, #tpu.memory_space<vmem>>, %arg4: memref<32x128xbf16, #tpu.memory_space<vmem>>, %arg5: memref<4x128xbf16, #tpu.memory_space<vmem>>, %arg6: memref<1x128xf32, #tpu.memory_space<vmem>>, %arg7: memref<128x128xbf16, #tpu.memory_space<vmem>>, %arg8: memref<1x128xf32, #tpu.memory_space<vmem>>, %arg9: memref<128x128xbf16, #tpu.memory_space<vmem>>, %arg10: memref<2x128xbf16, #tpu.memory_space<vmem>>, %arg11: memref<2x128xf32, #tpu.memory_space<vmem>>) attributes {dimension_semantics = [#tpu.dimension_semantics<parallel>, #tpu.dimension_semantics<arbitrary>], iteration_bounds = array<i64: 1, 1>, scalar_prefetch = 0 : i64, scratch_operands = 1 : i64, tpu.core_type = #tpu.core_type<tc>, window_params = [{transform_indices = @transform_0, window_bounds = array<i64: 2, 32>}, {transform_indices = @transform_1, window_bounds = array<i64: 2, 4>}, {transform_indices = @transform_2, window_bounds = array<i64: 32, 128>}, {pipeline_mode = #tpu.pipeline_mode<synchronous>, transform_indices = @transform_3, window_bounds = array<i64: 4, 128>}, {pipeline_mode = #tpu.pipeline_mode<synchronous>, transform_indices = @transform_4, window_bounds = array<i64: 1, 128>}, {pipeline_mode = #tpu.pipeline_mode<synchronous>, transform_indices = @transform_5, window_bounds = array<i64: 128, 128>}, {pipeline_mode = #tpu.pipeline_mode<synchronous>, transform_indices = @transform_6, window_bounds = array<i64: 1, 128>}, {pipeline_mode = #tpu.pipeline_mode<synchronous>, transform_indices = @transform_7, window_bounds = array<i64: 128, 128>}, {transform_indices = @transform_8, window_bounds = array<i64: 2, 128>}]} {
    %c0_i32 = arith.constant 0 : i32
    %0 = arith.cmpi eq, %arg1, %c0_i32 : i32
    %1 = arith.extui %0 : i1 to i32
    %c0_i32_0 = arith.constant 0 : i32
    %2 = arith.cmpi ne, %1, %c0_i32_0 : i32
    scf.if %2 {
      %c0_10 = arith.constant 0 : index
      %c0_11 = arith.constant 0 : index
      %13 = vector.load %arg3[%c0_10, %c0_11] : memref<2x4xf32, #tpu.memory_space<vmem>>, vector<2x4xf32>
      %14 = arith.truncf %13 : vector<2x4xf32> to vector<2x4xbf16>
      %c0_12 = arith.constant 0 : index
      %c0_13 = arith.constant 0 : index
      %15 = vector.load %arg5[%c0_12, %c0_13] : memref<4x128xbf16, #tpu.memory_space<vmem>>, vector<4x128xbf16>
      %cst_14 = arith.constant dense<0.000000e+00> : vector<2x128xf32>
      %16 = tpu.matmul %14, %15, %cst_14 {dimension_numbers = #tpu.dot_dimension_numbers<[1], [0], [0], [1], [0, 0, 1, 1], [], []>} : vector<2x4xbf16>, vector<4x128xbf16>, vector<2x128xf32> -> vector<2x128xf32>
      %c0_15 = arith.constant 0 : index
      %c0_16 = arith.constant 0 : index
      %17 = vector.load %arg6[%c0_15, %c0_16] : memref<1x128xf32, #tpu.memory_space<vmem>>, vector<1x128xf32>
      %18 = vector.broadcast %17 : vector<1x128xf32> to vector<2x128xf32>
      %19 = arith.addf %16, %18 : vector<2x128xf32>
      %c0_17 = arith.constant 0 : index
      %c0_18 = arith.constant 0 : index
      %20 = vector.load %arg11[%c0_17, %c0_18] : memref<2x128xf32, #tpu.memory_space<vmem>>, vector<2x128xf32>
      tpu.vector_store %arg11[%c0_17, %c0_18], %19 {strides = array<i32>} : memref<2x128xf32, #tpu.memory_space<vmem>>, vector<2x128xf32>,
    } else {
    }
    %c0 = arith.constant 0 : index
    %c0_1 = arith.constant 0 : index
    %3 = vector.load %arg2[%c0, %c0_1] : memref<2x32xf32, #tpu.memory_space<vmem>>, vector<2x32xf32>
    %c0_2 = arith.constant 0 : index
    %c0_3 = arith.constant 0 : index
    %4 = vector.load %arg11[%c0_2, %c0_3] : memref<2x128xf32, #tpu.memory_space<vmem>>, vector<2x128xf32>
    %5 = arith.truncf %3 : vector<2x32xf32> to vector<2x32xbf16>
    %c0_4 = arith.constant 0 : index
    %c0_5 = arith.constant 0 : index
    %6 = vector.load %arg4[%c0_4, %c0_5] : memref<32x128xbf16, #tpu.memory_space<vmem>>, vector<32x128xbf16>
    %cst = arith.constant dense<0.000000e+00> : vector<2x128xf32>
    %7 = tpu.matmul %5, %6, %cst {dimension_numbers = #tpu.dot_dimension_numbers<[1], [0], [0], [1], [0, 0, 1, 1], [], []>} : vector<2x32xbf16>, vector<32x128xbf16>, vector<2x128xf32> -> vector<2x128xf32>
    %8 = arith.addf %4, %7 : vector<2x128xf32>
    %c0_6 = arith.constant 0 : index
    %c0_7 = arith.constant 0 : index
    %9 = vector.load %arg11[%c0_6, %c0_7] : memref<2x128xf32, #tpu.memory_space<vmem>>, vector<2x128xf32>
    tpu.vector_store %arg11[%c0_6, %c0_7], %8 {strides = array<i32>} : memref<2x128xf32, #tpu.memory_space<vmem>>, vector<2x128xf32>,
    %c0_i32_8 = arith.constant 0 : i32
    %10 = arith.cmpi eq, %arg1, %c0_i32_8 : i32
    %11 = arith.extui %10 : i1 to i32
    %c0_i32_9 = arith.constant 0 : i32
    %12 = arith.cmpi ne, %11, %c0_i32_9 : i32
    scf.if %12 {
      %c0_10 = arith.constant 0 : index
      %c0_11 = arith.constant 0 : index
      %13 = vector.load %arg11[%c0_10, %c0_11] : memref<2x128xf32, #tpu.memory_space<vmem>>, vector<2x128xf32>
      %cst_12 = arith.constant 0.000000e+00 : f32
      %14 = vector.broadcast %cst_12 : f32 to vector<2x128xf32>
      %15 = arith.maximumf %13, %14 : vector<2x128xf32>
      %16 = arith.truncf %15 : vector<2x128xf32> to vector<2x128xbf16>
      %c0_13 = arith.constant 0 : index
      %c0_14 = arith.constant 0 : index
      %17 = vector.load %arg7[%c0_13, %c0_14] : memref<128x128xbf16, #tpu.memory_space<vmem>>, vector<128x128xbf16>
      %cst_15 = arith.constant dense<0.000000e+00> : vector<2x128xf32>
      %18 = tpu.matmul %16, %17, %cst_15 {dimension_numbers = #tpu.dot_dimension_numbers<[1], [0], [0], [1], [0, 0, 1, 1], [], []>} : vector<2x128xbf16>, vector<128x128xbf16>, vector<2x128xf32> -> vector<2x128xf32>
      %c0_16 = arith.constant 0 : index
      %c0_17 = arith.constant 0 : index
      %19 = vector.load %arg8[%c0_16, %c0_17] : memref<1x128xf32, #tpu.memory_space<vmem>>, vector<1x128xf32>
      %20 = vector.broadcast %19 : vector<1x128xf32> to vector<2x128xf32>
      %21 = arith.addf %18, %20 : vector<2x128xf32>
      %cst_18 = arith.constant 0.000000e+00 : f32
      %22 = vector.broadcast %cst_18 : f32 to vector<2x128xf32>
      %23 = arith.maximumf %21, %22 : vector<2x128xf32>
      %24 = arith.truncf %23 : vector<2x128xf32> to vector<2x128xbf16>
      %c0_19 = arith.constant 0 : index
      %c0_20 = arith.constant 0 : index
      %25 = vector.load %arg9[%c0_19, %c0_20] : memref<128x128xbf16, #tpu.memory_space<vmem>>, vector<128x128xbf16>
      %cst_21 = arith.constant dense<0.000000e+00> : vector<2x128xf32>
      %26 = tpu.matmul %24, %25, %cst_21 {dimension_numbers = #tpu.dot_dimension_numbers<[1], [0], [0], [1], [0, 0, 1, 1], [], []>} : vector<2x128xbf16>, vector<128x128xbf16>, vector<2x128xf32> -> vector<2x128xf32>
      %27 = arith.truncf %26 : vector<2x128xf32> to vector<2x128xbf16>
      %c0_22 = arith.constant 0 : index
      %c0_23 = arith.constant 0 : index
      %28 = vector.load %arg10[%c0_22, %c0_23] : memref<2x128xbf16, #tpu.memory_space<vmem>>, vector<2x128xbf16>
      tpu.vector_store %arg10[%c0_22, %c0_23], %27 {strides = array<i32>} : memref<2x128xbf16, #tpu.memory_space<vmem>>, vector<2x128xbf16>,
    } else {
    }
    return
  }
  func.func @transform_0(%arg0: i32, %arg1: i32) -> (i32, i32) {
    %c0_i32 = arith.constant 0 : i32
    return %arg0, %arg1 : i32, i32
  }
  func.func @transform_1(%arg0: i32, %arg1: i32) -> (i32, i32) {
    %c0_i32 = arith.constant 0 : i32
    %c0_i32_0 = arith.constant 0 : i32
    return %arg0, %c0_i32 : i32, i32
  }
  func.func @transform_2(%arg0: i32, %arg1: i32) -> (i32, i32) {
    %c0_i32 = arith.constant 0 : i32
    %c0_i32_0 = arith.constant 0 : i32
    return %arg1, %c0_i32 : i32, i32
  }
  func.func @transform_3(%arg0: i32, %arg1: i32) -> (i32, i32) {
    %c0_i32 = arith.constant 0 : i32
    %c0_i32_0 = arith.constant 0 : i32
    %c0_i32_1 = arith.constant 0 : i32
    return %c0_i32, %c0_i32_0 : i32, i32
  }
  func.func @transform_4(%arg0: i32, %arg1: i32) -> (i32, i32) {
    %c0_i32 = arith.constant 0 : i32
    %c0_i32_0 = arith.constant 0 : i32
    %c0_i32_1 = arith.constant 0 : i32
    return %c0_i32, %c0_i32_0 : i32, i32
  }
  func.func @transform_5(%arg0: i32, %arg1: i32) -> (i32, i32) {
    %c0_i32 = arith.constant 0 : i32
    %c0_i32_0 = arith.constant 0 : i32
    %c0_i32_1 = arith.constant 0 : i32
    return %c0_i32, %c0_i32_0 : i32, i32
  }
  func.func @transform_6(%arg0: i32, %arg1: i32) -> (i32, i32) {
    %c0_i32 = arith.constant 0 : i32
    %c0_i32_0 = arith.constant 0 : i32
    %c0_i32_1 = arith.constant 0 : i32
    return %c0_i32, %c0_i32_0 : i32, i32
  }
  func.func @transform_7(%arg0: i32, %arg1: i32) -> (i32, i32) {
    %c0_i32 = arith.constant 0 : i32
    %c0_i32_0 = arith.constant 0 : i32
    %c0_i32_1 = arith.constant 0 : i32
    return %c0_i32, %c0_i32_0 : i32, i32
  }
  func.func @transform_8(%arg0: i32, %arg1: i32) -> (i32, i32) {
    %c0_i32 = arith.constant 0 : i32
    %c0_i32_0 = arith.constant 0 : i32
    return %arg0, %c0_i32 : i32, i32
  }
}

</mosaic_0001>

<llo_original>
// kernel: tpu_custom_call.1
$region0: #{tpu_custom_call.1}
  #allocation0 [shape = 'u32[]', space=smem, size = 0x4, offset = 0x4, fixed_abs, tag = 'smem constant byte address 0x4 - core index']
  #allocation1 [shape = 'u32[144,128]{1,0:T(1,128)}', space=vmem, size = 0x12000, scoped, tag = 'internal scratch']
  #allocation2 [shape = 'f32[2,128]{1,0:T(2,128)}', space=vmem, size = 0x400, scoped, tag = 'scratch operand']
  %s0 = inlined_call_operand.hbm [shape: f32[2,32], index: 0, kind: input, shape index: {}]
  %s1 = inlined_call_operand.hbm [shape: f32[2,4], index: 1, kind: input, shape index: {}]
  %s2 = inlined_call_operand.hbm [shape: bf16[32,128], index: 2, kind: input, shape index: {}]
  %s3 = inlined_call_operand.vmem [shape: bf16[4,128], index: 3, kind: input, shape index: {}]
  %s4 = inlined_call_operand.vmem [shape: f32[1,128], index: 4, kind: input, shape index: {}]
  %s5 = inlined_call_operand.hbm [shape: bf16[128,128], index: 5, kind: input, shape index: {}]
  %s6 = inlined_call_operand.vmem [shape: f32[1,128], index: 6, kind: input, shape index: {}]
  %s7 = inlined_call_operand.hbm [shape: bf16[128,128], index: 7, kind: input, shape index: {}]
  %s8 = inlined_call_operand.hbm [shape: bf16[2,128], index: 8, kind: output, shape index: {}]
  %s9 = sld [smem:[#allocation0]]
  $region70: #{tpu_custom_call.1} parent=0
    _
  %s11 = ssub.s32 1, %s9
  %s12 = scalar_select 0, %s11, %s9
  $region1: #{tpu_custom_call.1} parent=0
    #allocation3 [shape = 'u8[1024]{0}', space=vmem, size = 0x400, scoped, tag = 'input window, operand 0, single buffered']
    #allocation4 [shape = 's32[1]{0}', space=sflag, size = 0x4, scoped, tag = 'scoped memory for tpu_custom_call.1']
    #allocation5 [shape = 's32[1]{0}', space=sflag, size = 0x4, scoped, tag = 'scoped memory for tpu_custom_call.1']
    #allocation6 [shape = 'u8[1024]{0}', space=vmem, size = 0x400, scoped, tag = 'input window, operand 1, single buffered']
    #allocation7 [shape = 's32[1]{0}', space=sflag, size = 0x4, scoped, tag = 'scoped memory for tpu_custom_call.1']
    #allocation8 [shape = 'u8[8192]{0}', space=vmem, size = 0x2000, scoped, tag = 'input window, operand 2, single buffered']
    #allocation9 [shape = 'u8[32768]{0}', space=vmem, size = 0x8000, scoped, tag = 'input window, operand 5, single buffered']
    #allocation10 [shape = 's32[1]{0}', space=sflag, size = 0x4, scoped, tag = 'scoped memory for tpu_custom_call.1']
    #allocation11 [shape = 'u8[32768]{0}', space=vmem, size = 0x8000, scoped, tag = 'input window, operand 7, single buffered']
    #allocation12 [shape = 'u8[512]{0}', space=vmem, size = 0x400, scoped, tag = 'output window, operand 0, single buffered']
    %13 = vsyncpa [#allocation4], 0
    %14 = vsyncpa [#allocation7], 0
    %15 = vsyncpa [#allocation10], 0
    %16 = vsyncpa [#allocation5], 0
    // Predicated region
    $region2: #{tpu_custom_call.1} parent=1 // pred_check
      _
    $region3: #{tpu_custom_call.1} parent=1 // pred_check_branch
      %18 = sbr.rel (0) target = $region5
    $region4: #{tpu_custom_call.1} parent=1 // pred_region
      %s20 = ssub.s32 32, 32
      %21 = vsyncadd [#allocation4], %s20
      %s23 = sshll.u32 [#allocation3], 4
      %s24 = int_to_ptr.vmem [resolvable:$true] %s23
      %26 = dma.hbm_to_vmem [thread:$0]  %s0, 32, %s24, [#allocation4]
    $region5: #{tpu_custom_call.1} parent=1 // pred_fallthru
      _
    // Predicated region
    $region6: #{tpu_custom_call.1} parent=1 // pred_check
      _
    $region7: #{tpu_custom_call.1} parent=1 // pred_check_branch
      %28 = sbr.rel (0) target = $region9
    $region8: #{tpu_custom_call.1} parent=1 // pred_region
      %s30 = ssub.s32 32, 32
      %31 = vsyncadd [#allocation7], %s30
      %s33 = sshll.u32 [#allocation6], 4
      %s34 = int_to_ptr.vmem [resolvable:$true] %s33
      %36 = dma.hbm_to_vmem [thread:$0]  %s1, 32, %s34, [#allocation7]
    $region9: #{tpu_custom_call.1} parent=1 // pred_fallthru
      _
    // Predicated region
    $region10: #{tpu_custom_call.1} parent=1 // pred_check
      _
    $region11: #{tpu_custom_call.1} parent=1 // pred_check_branch
      %38 = sbr.rel (0) target = $region13
    $region12: #{tpu_custom_call.1} parent=1 // pred_region
      %s40 = ssub.s32 256, 256
      %41 = vsyncadd [#allocation7], %s40
      %s42 = sshll.u32 [#allocation8], 4
      %s43 = int_to_ptr.vmem [resolvable:$true] %s42
      %48 = dma.hbm_to_vmem [thread:$0]  %s2, 256, %s43, [#allocation7], 64, 64, 4
    $region13: #{tpu_custom_call.1} parent=1 // pred_fallthru
      _
    // Predicated region
    $region14: #{tpu_custom_call.1} parent=1 // pred_check
      _
    $region15: #{tpu_custom_call.1} parent=1 // pred_check_branch
      %50 = sbr.rel (0) target = $region17
    $region16: #{tpu_custom_call.1} parent=1 // pred_region
      _
    $region17: #{tpu_custom_call.1} parent=1 // pred_fallthru
      _
    // Predicated region
    $region18: #{tpu_custom_call.1} parent=1 // pred_check
      _
    $region19: #{tpu_custom_call.1} parent=1 // pred_check_branch
      %52 = sbr.rel (0) target = $region21
    $region20: #{tpu_custom_call.1} parent=1 // pred_region
      _
    $region21: #{tpu_custom_call.1} parent=1 // pred_fallthru
      _
    // Predicated region
    $region22: #{tpu_custom_call.1} parent=1 // pred_check
      _
    $region23: #{tpu_custom_call.1} parent=1 // pred_check_branch
      %54 = sbr.rel (0) target = $region25
    $region24: #{tpu_custom_call.1} parent=1 // pred_region
      %s56 = ssub.s32 1024, 1024
      %57 = vsyncadd [#allocation10], %s56
      %s58 = sshll.u32 [#allocation9], 4
      %s59 = int_to_ptr.vmem [resolvable:$true] %s58
      %64 = dma.hbm_to_vmem [thread:$0]  %s5, 1024, %s59, [#allocation10], 64, 64, 4
    $region25: #{tpu_custom_call.1} parent=1 // pred_fallthru
      _
    // Predicated region
    $region26: #{tpu_custom_call.1} parent=1 // pred_check
      _
    $region27: #{tpu_custom_call.1} parent=1 // pred_check_branch
      %66 = sbr.rel (0) target = $region29
    $region28: #{tpu_custom_call.1} parent=1 // pred_region
      _
    $region29: #{tpu_custom_call.1} parent=1 // pred_fallthru
      _
    // Predicated region
    $region30: #{tpu_custom_call.1} parent=1 // pred_check
      _
    $region31: #{tpu_custom_call.1} parent=1 // pred_check_branch
      %68 = sbr.rel (0) target = $region33
    $region32: #{tpu_custom_call.1} parent=1 // pred_region
      %s70 = ssub.s32 1024, 1024
      %71 = vsyncadd [#allocation10], %s70
      %s72 = sshll.u32 [#allocation11], 4
      %s73 = int_to_ptr.vmem [resolvable:$true] %s72
      %78 = dma.hbm_to_vmem [thread:$0]  %s7, 1024, %s73, [#allocation10], 64, 64, 4
    $region33: #{tpu_custom_call.1} parent=1 // pred_fallthru
      _
    // Predicated region
    $region34: #{tpu_custom_call.1} parent=1 // pred_check
      _
    $region35: #{tpu_custom_call.1} parent=1 // pred_check_branch
      %80 = sbr.rel (0) target = $region37
    $region36: #{tpu_custom_call.1} parent=1 // pred_region
      %81 = dma.done [#allocation4], 32
    $region37: #{tpu_custom_call.1} parent=1 // pred_fallthru
      _
    // Predicated region
    $region38: #{tpu_custom_call.1} parent=1 // pred_check
      _
    $region39: #{tpu_custom_call.1} parent=1 // pred_check_branch
      %83 = sbr.rel (0) target = $region41
    $region40: #{tpu_custom_call.1} parent=1 // pred_region
      %84 = dma.done [#allocation7], 32
    $region41: #{tpu_custom_call.1} parent=1 // pred_fallthru
      _
    // Predicated region
    $region42: #{tpu_custom_call.1} parent=1 // pred_check
      _
    $region43: #{tpu_custom_call.1} parent=1 // pred_check_branch
      %86 = sbr.rel (0) target = $region45
    $region44: #{tpu_custom_call.1} parent=1 // pred_region
      %87 = dma.done [#allocation7], 256
    $region45: #{tpu_custom_call.1} parent=1 // pred_fallthru
      _
    // Predicated region
    $region46: #{tpu_custom_call.1} parent=1 // pred_check
      _
    $region47: #{tpu_custom_call.1} parent=1 // pred_check_branch
      %89 = sbr.rel (0) target = $region49
    $region48: #{tpu_custom_call.1} parent=1 // pred_region
      %90 = dma.done [#allocation10], 1024
    $region49: #{tpu_custom_call.1} parent=1 // pred_fallthru
      _
    // Predicated region
    $region50: #{tpu_custom_call.1} parent=1 // pred_check
      _
    $region51: #{tpu_custom_call.1} parent=1 // pred_check_branch
      %92 = sbr.rel (0) target = $region53
    $region52: #{tpu_custom_call.1} parent=1 // pred_region
      %93 = dma.done [#allocation10], 1024
    $region53: #{tpu_custom_call.1} parent=1 // pred_fallthru
      _
    %p95 = scmp.eq.s32.totalorder 0, 0
    // Predicated region
    $region54: #{tpu_custom_call.1} parent=1 // pred_check
      %p96 = pneg %p95
    $region55: #{tpu_custom_call.1} parent=1 // pred_check_branch
      %98 = sbr.rel (%p96) target = $region57
    $region56: #{tpu_custom_call.1} parent=1 // pred_region
      %v99 = vld [vmem:[#allocation6] sm:$0x3]
      %v100 = vpack.c.bf16 %v99, %v99
      %v101 = vld [vmem:[%s3] sm:$0x3]
      %v102 = vld [vmem:[%s4] sm:$0x1]
      %v104 = vlaneseq
      %v105 = vshrl.u32 %v104, 7
      %v106 = vsub.s32 0, %v105
      %v107 = vrot.slane %v102, %v106
      %vm109 = vcmask 31744
      %v111 = vsel %vm109, %v100, 0
      %vm113 = vcmask 1041408
      %v115 = vsel %vm113, %v101, 0
      %117 = vmatprep.subr.bf16.mxu0 0
      %118 = vmatpush1.bf16.msra.mxu0 0
      %119 = vmatprep.subr.bf16.mxu0 0
      %120 = vmatpush1.bf16.msra.mxu0 0
      %121 = vmatprep.subr.bf16.mxu0 0
      %122 = vmatpush1.bf16.msra.mxu0 0
      %123 = vmatprep.subr.bf16.mxu0 0
      %124 = vmatpush1.bf16.msra.mxu0 0
      %125 = vmatprep.subr.bf16.mxu0 0
      %126 = vmatpush1.bf16.msra.mxu0 0
      %127 = vmatprep.subr.bf16.mxu0 0
      %128 = vmatpush1.bf16.msra.mxu0 0
      %129 = vmatprep.subr.bf16.mxu0 0
      %130 = vmatpush1.bf16.msra.mxu0 0
      %131 = vmatprep.subr.bf16.mxu0 0
      %132 = vmatpush1.bf16.msra.mxu0 %v115
      %133 = vmatprep.subr.bf16.mxu0 0
      %134 = vmatpush2.bf16.msra.mxu0 0
      %135 = vmatprep.subr.bf16.mxu0 0
      %136 = vmatpush2.bf16.msra.mxu0 0
      %137 = vmatprep.subr.bf16.mxu0 0
      %138 = vmatpush2.bf16.msra.mxu0 0
      %139 = vmatprep.subr.bf16.mxu0 0
      %140 = vmatpush2.bf16.msra.mxu0 0
      %141 = vmatprep.subr.bf16.mxu0 0
      %142 = vmatpush2.bf16.msra.mxu0 0
      %143 = vmatprep.subr.bf16.mxu0 0
      %144 = vmatpush2.bf16.msra.mxu0 0
      %145 = vmatprep.subr.bf16.mxu0 0
      %146 = vmatpush2.bf16.msra.mxu0 0
      %147 = vmatprep.subr.bf16.mxu0 0
      %148 = vmatpush2.bf16.msra.mxu0 0
      %149 = vmatprep.mubr.bf16.mxu0 0
      %150 = vmatmul.mubr.bf16.gmra.mxu0 %v111
      %v151 = vpop.f32.mrf.mxu0
      %v152 = vadd.f32 %v107, %v151
      %v153 = vpop.f32.mrf.mxu0
      %v154 = vpop.f32.mrf.mxu0
      %v155 = vpop.f32.mrf.mxu0
      %156 = vdwg.mxu0
      %157 = vst [vmem:[#allocation2] sm:$0x3] %v152
    $region57: #{tpu_custom_call.1} parent=1 // pred_fallthru
      _
    %v158 = vld [vmem:[#allocation3] sm:$0x3]
    %v159 = vld [vmem:[#allocation2] sm:$0x3]
    %v160 = vpack.c.bf16 %v158, %v158
    %v161 = vld [vmem:[#allocation8] sm:$0xf]
    %v162 = vld [vmem:[#allocation8 + $0x4] sm:$0xf]
    %v163 = vld [vmem:[#allocation8 + $0x8] sm:$0xf]
    %v164 = vld [vmem:[#allocation8 + $0xc] sm:$0xf]
    %v169 = vunpack.c.l.b16 %v161
    %v170 = vunpack.c.l.b16 %v162
    %v171 = vunpack.c.l.b16 %v163
    %v172 = vunpack.c.l.b16 %v164
    %v173 = vpack.c.b16 %v170, %v169
    %v174 = vpack.c.b16 %v172, %v171
    %vm177 = vcmask 261120
    %v179 = vsel %vm177, %v160, 0
    %181 = vmatprep.subr.bf16.mxu0 0
    %182 = vmatpush1.bf16.msra.mxu0 0
    %183 = vmatprep.subr.bf16.mxu0 0
    %184 = vmatpush1.bf16.msra.mxu0 0
    %185 = vmatprep.subr.bf16.mxu0 0
    %186 = vmatpush1.bf16.msra.mxu0 0
    %187 = vmatprep.subr.bf16.mxu0 0
    %188 = vmatpush1.bf16.msra.mxu0 0
    %189 = vmatprep.subr.bf16.mxu0 0
    %190 = vmatpush1.bf16.msra.mxu0 0
    %191 = vmatprep.subr.bf16.mxu0 0
    %192 = vmatpush1.bf16.msra.mxu0 0
    %193 = vmatprep.subr.bf16.mxu0 0
    %194 = vmatpush1.bf16.msra.mxu0 %v174
    %195 = vmatprep.subr.bf16.mxu0 0
    %196 = vmatpush1.bf16.msra.mxu0 %v173
    %197 = vmatprep.subr.bf16.mxu0 0
    %198 = vmatpush2.bf16.msra.mxu0 0
    %199 = vmatprep.subr.bf16.mxu0 0
    %200 = vmatpush2.bf16.msra.mxu0 0
    %201 = vmatprep.subr.bf16.mxu0 0
    %202 = vmatpush2.bf16.msra.mxu0 0
    %203 = vmatprep.subr.bf16.mxu0 0
    %204 = vmatpush2.bf16.msra.mxu0 0
    %205 = vmatprep.subr.bf16.mxu0 0
    %206 = vmatpush2.bf16.msra.mxu0 0
    %207 = vmatprep.subr.bf16.mxu0 0
    %208 = vmatpush2.bf16.msra.mxu0 0
    %209 = vmatprep.subr.bf16.mxu0 0
    %210 = vmatpush2.bf16.msra.mxu0 0
    %211 = vmatprep.subr.bf16.mxu0 0
    %212 = vmatpush2.bf16.msra.mxu0 0
    %213 = vmatprep.mubr.bf16.mxu0 0
    %214 = vmatmul.mubr.bf16.gmra.mxu0 %v179
    %v215 = vpop.f32.mrf.mxu0
    %v216 = vadd.f32 0.0, %v215
    %v217 = vpop.f32.mrf.mxu0
    %v218 = vpop.f32.mrf.mxu0
    %v219 = vpop.f32.mrf.mxu0
    %220 = vdwg.mxu0
    %v221 = vadd.f32 %v159, %v216
    %222 = vst [vmem:[#allocation2] sm:$0x3] %v221
    // Predicated region
    $region58: #{tpu_custom_call.1} parent=1 // pred_check
      %p223 = pneg %p95
    $region59: #{tpu_custom_call.1} parent=1 // pred_check_branch
      %225 = sbr.rel (%p223) target = $region61
    $region60: #{tpu_custom_call.1} parent=1 // pred_region
      %v226 = vld [vmem:[#allocation2] sm:$0x3]
      %v227 = vmax.f32 %v226, 0.0
      %v228 = vpack.c.bf16 %v227, %v227
      %v229 = vld [vmem:[#allocation9] sm:$0xf]
      %v230 = vld [vmem:[#allocation9 + $0x4] sm:$0xf]
      %v231 = vld [vmem:[#allocation9 + $0x8] sm:$0xf]
      %v232 = vld [vmem:[#allocation9 + $0xc] sm:$0xf]
      %v233 = vld [vmem:[#allocation9 + $0x10] sm:$0xf]
      %v234 = vld [vmem:[#allocation9 + $0x14] sm:$0xf]
      %v235 = vld [vmem:[#allocation9 + $0x18] sm:$0xf]
      %v236 = vld [vmem:[#allocation9 + $0x1c] sm:$0xf]
      %v237 = vld [vmem:[#allocation9 + $0x20] sm:$0xf]
      %v238 = vld [vmem:[#allocation9 + $0x24] sm:$0xf]
      %v239 = vld [vmem:[#allocation9 + $0x28] sm:$0xf]
      %v240 = vld [vmem:[#allocation9 + $0x2c] sm:$0xf]
      %v241 = vld [vmem:[#allocation9 + $0x30] sm:$0xf]
      %v242 = vld [vmem:[#allocation9 + $0x34] sm:$0xf]
      %v243 = vld [vmem:[#allocation9 + $0x38] sm:$0xf]
      %v244 = vld [vmem:[#allocation9 + $0x3c] sm:$0xf]
      %v245 = vld [vmem:[%s6] sm:$0x1]
      %v247 = vlaneseq
      %v248 = vshrl.u32 %v247, 7
      %v249 = vsub.s32 0, %v248
      %v250 = vrot.slane %v245, %v249
      %v268 = vunpack.c.l.b16 %v229
      %v269 = vunpack.c.l.b16 %v230
      %v270 = vunpack.c.l.b16 %v231
      %v271 = vunpack.c.l.b16 %v232
      %v272 = vunpack.c.l.b16 %v233
      %v273 = vunpack.c.l.b16 %v234
      %v274 = vunpack.c.l.b16 %v235
      %v275 = vunpack.c.l.b16 %v236
      %v276 = vunpack.c.l.b16 %v237
      %v277 = vunpack.c.l.b16 %v238
      %v278 = vunpack.c.l.b16 %v239
      %v279 = vunpack.c.l.b16 %v240
      %v280 = vunpack.c.l.b16 %v241
      %v281 = vunpack.c.l.b16 %v242
      %v282 = vunpack.c.l.b16 %v243
      %v283 = vunpack.c.l.b16 %v244
      %v284 = vpack.c.b16 %v269, %v268
      %v285 = vpack.c.b16 %v271, %v270
      %v286 = vpack.c.b16 %v273, %v272
      %v287 = vpack.c.b16 %v275, %v274
      %v288 = vpack.c.b16 %v277, %v276
      %v289 = vpack.c.b16 %v279, %v278
      %v290 = vpack.c.b16 %v281, %v280
      %v291 = vpack.c.b16 %v283, %v282
      %300 = vmatprep.subr.bf16.mxu0 0
      %301 = vmatpush1.bf16.msra.mxu0 %v291
      %302 = vmatprep.subr.bf16.mxu0 0
      %303 = vmatpush1.bf16.msra.mxu0 %v290
      %304 = vmatprep.subr.bf16.mxu0 0
      %305 = vmatpush1.bf16.msra.mxu0 %v289
      %306 = vmatprep.subr.bf16.mxu0 0
      %307 = vmatpush1.bf16.msra.mxu0 %v288
      %308 = vmatprep.subr.bf16.mxu0 0
      %309 = vmatpush1.bf16.msra.mxu0 %v287
      %310 = vmatprep.subr.bf16.mxu0 0
      %311 = vmatpush1.bf16.msra.mxu0 %v286
      %312 = vmatprep.subr.bf16.mxu0 0
      %313 = vmatpush1.bf16.msra.mxu0 %v285
      %314 = vmatprep.subr.bf16.mxu0 0
      %315 = vmatpush1.bf16.msra.mxu0 %v284
      %316 = vmatprep.subr.bf16.mxu0 0
      %317 = vmatpush2.bf16.msra.mxu0 0
      %318 = vmatprep.subr.bf16.mxu0 0
      %319 = vmatpush2.bf16.msra.mxu0 0
      %320 = vmatprep.subr.bf16.mxu0 0
      %321 = vmatpush2.bf16.msra.mxu0 0
      %322 = vmatprep.subr.bf16.mxu0 0
      %323 = vmatpush2.bf16.msra.mxu0 0
      %324 = vmatprep.subr.bf16.mxu0 0
      %325 = vmatpush2.bf16.msra.mxu0 0
      %326 = vmatprep.subr.bf16.mxu0 0
      %327 = vmatpush2.bf16.msra.mxu0 0
      %328 = vmatprep.subr.bf16.mxu0 0
      %329 = vmatpush2.bf16.msra.mxu0 0
      %330 = vmatprep.subr.bf16.mxu0 0
      %331 = vmatpush2.bf16.msra.mxu0 0
      %332 = vmatprep.mubr.bf16.mxu0 0
      %333 = vmatmul.mubr.bf16.gmra.mxu0 %v228
      %v334 = vpop.f32.mrf.mxu0
      %v335 = vadd.f32 %v250, %v334
      %v336 = vpop.f32.mrf.mxu0
      %v337 = vpop.f32.mrf.mxu0
      %v338 = vpop.f32.mrf.mxu0
      %339 = vdwg.mxu0
      %v340 = vmax.f32 %v335, 0.0
      %v341 = vpack.c.bf16 %v340, %v340
      %v342 = vld [vmem:[#allocation11] sm:$0xf]
      %v343 = vld [vmem:[#allocation11 + $0x4] sm:$0xf]
      %v344 = vld [vmem:[#allocation11 + $0x8] sm:$0xf]
      %v345 = vld [vmem:[#allocation11 + $0xc] sm:$0xf]
      %v346 = vld [vmem:[#allocation11 + $0x10] sm:$0xf]
      %v347 = vld [vmem:[#allocation11 + $0x14] sm:$0xf]
      %v348 = vld [vmem:[#allocation11 + $0x18] sm:$0xf]
      %v349 = vld [vmem:[#allocation11 + $0x1c] sm:$0xf]
      %v350 = vld [vmem:[#allocation11 + $0x20] sm:$0xf]
      %v351 = vld [vmem:[#allocation11 + $0x24] sm:$0xf]
      %v352 = vld [vmem:[#allocation11 + $0x28] sm:$0xf]
      %v353 = vld [vmem:[#allocation11 + $0x2c] sm:$0xf]
      %v354 = vld [vmem:[#allocation11 + $0x30] sm:$0xf]
      %v355 = vld [vmem:[#allocation11 + $0x34] sm:$0xf]
      %v356 = vld [vmem:[#allocation11 + $0x38] sm:$0xf]
      %v357 = vld [vmem:[#allocation11 + $0x3c] sm:$0xf]
      %v374 = vunpack.c.l.b16 %v342
      %v375 = vunpack.c.l.b16 %v343
      %v376 = vunpack.c.l.b16 %v344
      %v377 = vunpack.c.l.b16 %v345
      %v378 = vunpack.c.l.b16 %v346
      %v379 = vunpack.c.l.b16 %v347
      %v380 = vunpack.c.l.b16 %v348
      %v381 = vunpack.c.l.b16 %v349
      %v382 = vunpack.c.l.b16 %v350
      %v383 = vunpack.c.l.b16 %v351
      %v384 = vunpack.c.l.b16 %v352
      %v385 = vunpack.c.l.b16 %v353
      %v386 = vunpack.c.l.b16 %v354
      %v387 = vunpack.c.l.b16 %v355
      %v388 = vunpack.c.l.b16 %v356
      %v389 = vunpack.c.l.b16 %v357
      %v390 = vpack.c.b16 %v375, %v374
      %v391 = vpack.c.b16 %v377, %v376
      %v392 = vpack.c.b16 %v379, %v378
      %v393 = vpack.c.b16 %v381, %v380
      %v394 = vpack.c.b16 %v383, %v382
      %v395 = vpack.c.b16 %v385, %v384
      %v396 = vpack.c.b16 %v387, %v386
      %v397 = vpack.c.b16 %v389, %v388
      %406 = vmatprep.subr.bf16.mxu0 0
      %407 = vmatpush1.bf16.msra.mxu0 %v397
      %408 = vmatprep.subr.bf16.mxu0 0
      %409 = vmatpush1.bf16.msra.mxu0 %v396
      %410 = vmatprep.subr.bf16.mxu0 0
      %411 = vmatpush1.bf16.msra.mxu0 %v395
      %412 = vmatprep.subr.bf16.mxu0 0
      %413 = vmatpush1.bf16.msra.mxu0 %v394
      %414 = vmatprep.subr.bf16.mxu0 0
      %415 = vmatpush1.bf16.msra.mxu0 %v393
      %416 = vmatprep.subr.bf16.mxu0 0
      %417 = vmatpush1.bf16.msra.mxu0 %v392
      %418 = vmatprep.subr.bf16.mxu0 0
      %419 = vmatpush1.bf16.msra.mxu0 %v391
      %420 = vmatprep.subr.bf16.mxu0 0
      %421 = vmatpush1.bf16.msra.mxu0 %v390
      %422 = vmatprep.subr.bf16.mxu0 0
      %423 = vmatpush2.bf16.msra.mxu0 0
      %424 = vmatprep.subr.bf16.mxu0 0
      %425 = vmatpush2.bf16.msra.mxu0 0
      %426 = vmatprep.subr.bf16.mxu0 0
      %427 = vmatpush2.bf16.msra.mxu0 0
      %428 = vmatprep.subr.bf16.mxu0 0
      %429 = vmatpush2.bf16.msra.mxu0 0
      %430 = vmatprep.subr.bf16.mxu0 0
      %431 = vmatpush2.bf16.msra.mxu0 0
      %432 = vmatprep.subr.bf16.mxu0 0
      %433 = vmatpush2.bf16.msra.mxu0 0
      %434 = vmatprep.subr.bf16.mxu0 0
      %435 = vmatpush2.bf16.msra.mxu0 0
      %436 = vmatprep.subr.bf16.mxu0 0
      %437 = vmatpush2.bf16.msra.mxu0 0
      %438 = vmatprep.mubr.bf16.mxu0 0
      %439 = vmatmul.mubr.bf16.gmra.mxu0 %v341
      %v440 = vpop.f32.mrf.mxu0
      %v441 = vadd.f32 0.0, %v440
      %v442 = vpop.f32.mrf.mxu0
      %v443 = vpop.f32.mrf.mxu0
      %v444 = vpop.f32.mrf.mxu0
      %445 = vdwg.mxu0
      %v446 = vpack.c.bf16 %v441, %v441
      %447 = vst [vmem:[#allocation12] sm:$0x1] %v446
    $region61: #{tpu_custom_call.1} parent=1 // pred_fallthru
      _
    // Predicated region
    $region62: #{tpu_custom_call.1} parent=1 // pred_check
      _
    $region63: #{tpu_custom_call.1} parent=1 // pred_check_branch
      %449 = sbr.rel (0) target = $region65
    $region64: #{tpu_custom_call.1} parent=1 // pred_region
      %s451 = ssub.s32 16, 16
      %452 = vsyncadd [#allocation5], %s451
      %s454 = sshll.u32 [#allocation12], 4
      %s455 = int_to_ptr.vmem [resolvable:$true] %s454
      %457 = dma.vmem_to_hbm [thread:$0]  %s455, 16, %s8, [#allocation5]
    $region65: #{tpu_custom_call.1} parent=1 // pred_fallthru
      _
    // Predicated region
    $region66: #{tpu_custom_call.1} parent=1 // pred_check
      _
    $region67: #{tpu_custom_call.1} parent=1 // pred_check_branch
      %459 = sbr.rel (0) target = $region69
    $region68: #{tpu_custom_call.1} parent=1 // pred_region
      %460 = dma.done [#allocation5], 16
    $region69: #{tpu_custom_call.1} parent=1 // pred_fallthru
      _
    %461 = vsyncpa [#allocation4], 1
    %462 = vsyncpa [#allocation7], 1
    %463 = vsyncpa [#allocation10], 1
    %464 = vsyncpa [#allocation5], 1

</llo_original>
